<compile_context>
chip_gen: v7x
topology: tpu7x:2x2x1
jax: 0.10.0
libtpu: 0.0.40
codegen_flags: <defaults>
</compile_context>

<pallas_src>
import jax
import jax.numpy as jnp
from jax.experimental import pallas as pl
from jax.experimental.pallas import tpu as pltpu

NEG_SLOPE = 0.01                     # nn.LeakyReLU() default
_VMEM_LIMIT = 32 * 1024 * 1024       # conservative scoped-VMEM budget (all gens)


def _round_up(n, m):
    return (n + m - 1) // m * m


# ---------------------------------------------------------------------------
# Fused MLP kernel: every layer of one MiniMLP / DropoutMLP in a single
# pallas_call.  Hidden layers: h = dropout(leaky_relu(h @ W + b)); last layer
# is a plain linear.  Weights are stored (in, out) == torch_W.T so the math is
# exactly PyTorch's x @ W.T + b.
# ---------------------------------------------------------------------------
def _make_mlp_kernel(num_layers, p, matmul_dtype):
    use_dropout = p > 0.0
    if use_dropout:
        thresh = min(int(round(p * float(2 ** 32))), 2 ** 32 - 1)
        scale = 1.0 / (1.0 - p)

    def mm(a, w):
        if matmul_dtype is not None:              # bf16 operands on v6e/v7x
            a = a.astype(matmul_dtype)
            w = w.astype(matmul_dtype)
        return jnp.dot(a, w, preferred_element_type=jnp.float32)

    def kernel(*refs):
        x_ref = refs[0]
        wb = refs[1:1 + 2 * num_layers]
        n_bits = (num_layers - 1) if use_dropout else 0
        bits_refs = refs[1 + 2 * num_layers:1 + 2 * num_layers + n_bits]
        o_ref = refs[1 + 2 * num_layers + n_bits]

        h = x_ref[...]                            # (Bt, Din) f32
        for l in range(num_layers - 1):
            w = wb[2 * l][...]
            b = wb[2 * l + 1][...]                # (1, Dout) — single broadcast add
            h = mm(h, w) + b
            h = jnp.where(h >= 0.0, h, NEG_SLOPE * h)        # LeakyReLU, f32 VPU
            if use_dropout:
                bits = bits_refs[l][...]                      # uint32
                keep = bits >= jnp.uint32(thresh)             # drop w.p. p
                h = jnp.where(keep, h * scale, 0.0)
        y = mm(h, wb[-2][...]) + wb[-1][...]
        o_ref[...] = y.astype(o_ref.dtype)

    return kernel


def fused_mlp(x, params, *, p=0.0, dropout_bits=None, block_rows=256,
              matmul_dtype=None):
    """Run a whole MiniMLP/DropoutMLP in one Pallas call, gridded over rows.

    params: list of (W (Din, Dout), b (1, Dout)).
    dropout_bits (if p > 0): list of uint32 arrays, one per hidden layer,
    shaped like that layer's output — integer-threshold dropout in-kernel.
    """
    n, din = x.shape
    num_layers = len(params)
    dims = [din] + [w.shape[1] for (w, _) in params]

    # Row tile: largest multiple-of-8 tile <= block_rows.  Sized so that the two
    # double-buffered activation tiles plus the resident weights stay inside the
    # 32 MiB scoped-VMEM budget even on v7x (64 MiB physical part).
    bt = min(block_rows, _round_up(n, 8))
    n_pad = _round_up(n, bt)
    if n_pad != n:
        x = jnp.pad(x, ((0, n_pad - n), (0, 0)))

    inputs = [x]
    in_specs = [pl.BlockSpec((bt, dims[0]), lambda i: (i, 0))]
    for l, (w, b) in enumerate(params):
        inputs += [w, b]
        in_specs += [
            pl.BlockSpec((dims[l], dims[l + 1]), lambda i: (0, 0)),   # W resident
            pl.BlockSpec((1, dims[l + 1]), lambda i: (0, 0)),         # b resident
        ]
    if p > 0.0:
        assert dropout_bits is not None and len(dropout_bits) == num_layers - 1
        for l, bits in enumerate(dropout_bits):
            assert bits.shape == (n, dims[l + 1]) and bits.dtype == jnp.uint32
            if n_pad != n:
                bits = jnp.pad(bits, ((0, n_pad - n), (0, 0)))
            inputs.append(bits)
            in_specs.append(pl.BlockSpec((bt, dims[l + 1]), lambda i: (i, 0)))

    out = pl.pallas_call(
        _make_mlp_kernel(num_layers, float(p), matmul_dtype),
        out_shape=jax.ShapeDtypeStruct((n_pad, dims[-1]), x.dtype),
        grid=(n_pad // bt,),
        in_specs=in_specs,
        out_specs=pl.BlockSpec((bt, dims[-1]), lambda i: (i, 0)),
        compiler_params=pltpu.CompilerParams(
            dimension_semantics=("parallel",),   # shard row tiles over v7x's 2 TCs
            vmem_limit_bytes=_VMEM_LIMIT,
        ),
    )(*inputs)
    return out[:n]


# ---------------------------------------------------------------------------
# Graph plumbing kept in plain JAX.
# TODO(synk): data-dependent edge gather / scatter-mean / per-graph softmax have
# no clean BlockSpec expression at this scale; they stay outside the kernels.
# ---------------------------------------------------------------------------
def _scatter_mean(values, index, num_segments):
    s = jax.ops.segment_sum(values, index, num_segments=num_segments)
    cnt = jax.ops.segment_sum(jnp.ones((values.shape[0], 1), values.dtype),
                              index, num_segments=num_segments)
    return s / jnp.maximum(cnt, 1.0)


def _softmax_aggregate(x, batch, num_graphs, t):
    # PyG SoftmaxAggregation(learn=True): alpha = softmax(t * x per graph);
    # out = sum(alpha * x).
    scaled = t * x
    seg_max = jax.ops.segment_max(scaled, batch, num_segments=num_graphs)
    e = jnp.exp(scaled - seg_max[batch])
    denom = jax.ops.segment_sum(e, batch, num_segments=num_graphs)
    alpha = e / denom[batch]
    return jax.ops.segment_sum(alpha * x, batch, num_segments=num_graphs)


# ---------------------------------------------------------------------------
# Parameter init (mimics nn.Linear default U(-1/sqrt(fan_in), 1/sqrt(fan_in)))
# ---------------------------------------------------------------------------
def _init_linear(key, din, dout):
    kw, kb = jax.random.split(key)
    bound = 1.0 / float(din) ** 0.5
    w = jax.random.uniform(kw, (din, dout), jnp.float32, -bound, bound)
    b = jax.random.uniform(kb, (1, dout), jnp.float32, -bound, bound)
    return w, b


def _init_mlp(key, inputs, targets, hidden):
    dims = [inputs] + list(hidden) + [targets]
    params = []
    for din, dout in zip(dims[:-1], dims[1:]):
        key, sub = jax.random.split(key)
        params.append(_init_linear(sub, din, dout))
    return params


# ---------------------------------------------------------------------------
# ZigZag model (latent=False: the network output is looped back into the input)
# ---------------------------------------------------------------------------
class ZigZagPallas:
    def __init__(self, node_features, edge_features, hidden_features, n_blocks,
                 out_nodes, out_glob, z0=0.0, *, key, matmul_dtype=None):
        self.z0 = float(z0)
        self.out_nodes = out_nodes
        self.out_glob = out_glob
        self.dim_reentrant = out_nodes            # latent=False -> loop the output
        self.matmul_dtype = matmul_dtype
        h = hidden_features

        keys = jax.random.split(key, 6 + 2 * n_blocks)
        in_nodes = node_features + out_nodes      # ZigZag re-entrant node input
        self.encoder_nodes = _init_mlp(keys[0], in_nodes, h, [h])
        self.encoder_edges = _init_mlp(keys[1], edge_features, h, [h])
        self.blocks = []
        for i in range(n_blocks):
            edge_mlp = _init_mlp(keys[2 + 2 * i], h + 2 * h, h, [h])   # update_edge
            node_mlp = _init_mlp(keys[3 + 2 * i], h + h, h, [h])       # update_node
            self.blocks.append((edge_mlp, node_mlp))
        self.decoder_nodes = _init_mlp(keys[2 + 2 * n_blocks], h, out_nodes, [h])
        if out_glob > 0:
            self.glob_t = 1.0                      # SoftmaxAggregation temperature
            self.decoder_glob = _init_mlp(keys[3 + 2 * n_blocks], h, out_glob, [h, h])

    def _mlp(self, x, params):
        return fused_mlp(x, params, matmul_dtype=self.matmul_dtype)

    def __call__(self, x, edge_index, edge_attr, batch, num_graphs, y=None):
        n = x.shape[0]
        if y is None:                              # first pass: constant z0 feedback
            y = jnp.full((n, self.dim_reentrant), self.z0, dtype=x.dtype)
        x_in = jnp.concatenate([x, y], axis=1)

        node_f = self._mlp(x_in, self.encoder_nodes)
        edge_f = self._mlp(edge_attr, self.encoder_edges)

        src, dst = edge_index[0], edge_index[1]    # flow: source -> target
        for edge_mlp, node_mlp in self.blocks:
            x_i = node_f[dst]                      # target node features
            x_j = node_f[src]                      # source node features
            msg = self._mlp(jnp.concatenate([x_i, x_j, edge_f], axis=-1), edge_mlp)
            aggr = _scatter_mean(msg, dst, n)      # torch_scatter 'mean'
            node_upd = self._mlp(jnp.concatenate([node_f, aggr], axis=-1), node_mlp)
            edge_f = msg + edge_f                  # residual on edges
            node_f = node_upd + node_f             # residual on nodes

        y_nodes = self._mlp(node_f, self.decoder_nodes)
        if self.out_glob > 0:
            glob_in = _softmax_aggregate(node_f, batch, num_graphs, self.glob_t)
            y_glob = self._mlp(glob_in, self.decoder_glob)
            return y_nodes, y_glob
        return y_nodes

    def predict_with_var(self, x, edge_index, edge_attr, batch, num_graphs):
        """ZigZag(return_var=True): two passes, feeding the output back in."""
        y1, g1 = self(x, edge_index, edge_attr, batch, num_graphs)
        y2, g2 = self(x, edge_index, edge_attr, batch, num_graphs, y=y1)
        return (0.5 * (y1 + y2), 0.5 * (g1 + g2),
                0.25 * (y1 - y2) ** 2, 0.25 * (g1 - g2) ** 2)


if __name__ == "__main__":
    key = jax.random.PRNGKey(0)
    k_model, k_x, k_e, k_src, k_dst, k_dp, k_db = jax.random.split(key, 7)

    # Small graph: 32 nodes, 96 directed edges, one graph in the batch.
    num_nodes, num_edges = 32, 96
    node_features, edge_features = 8, 4
    hidden_features = 128            # lane-dense (multiple of 128)
    n_blocks, out_nodes, out_glob = 2, 4, 2

    x = jax.random.normal(k_x, (num_nodes, node_features), jnp.float32)
    edge_attr = jax.random.normal(k_e, (num_edges, edge_features), jnp.float32)
    src = jax.random.randint(k_src, (num_edges,), 0, num_nodes)
    dst = jax.random.randint(k_dst, (num_edges,), 0, num_nodes)
    edge_index = jnp.stack([src, dst])
    batch = jnp.zeros((num_nodes,), jnp.int32)

    model = ZigZagPallas(node_features, edge_features, hidden_features,
                         n_blocks, out_nodes, out_glob, z0=0.0, key=k_model)

    # Single ZigZag pass (y=None -> z0 feedback), then the two-pass variance call.
    y_nodes, y_glob = model(x, edge_index, edge_attr, batch, num_graphs=1)
    mean_n, mean_g, var_n, var_g = model.predict_with_var(
        x, edge_index, edge_attr, batch, num_graphs=1)
    jax.block_until_ready((y_nodes, y_glob, mean_n, mean_g, var_n, var_g))

    assert y_nodes.shape == (num_nodes, out_nodes)
    assert y_glob.shape == (1, out_glob)
    assert var_n.shape == (num_nodes, out_nodes) and bool(jnp.all(var_n >= 0))
    assert bool(jnp.all(jnp.isfinite(y_nodes))) and bool(jnp.all(jnp.isfinite(y_glob)))

    # Smoke-test the fused DropoutMLP path (integer-threshold dropout on
    # host-generated bits) used when EncodeProcessDecode(dropout=True).
    p = 0.3
    dmlp = _init_mlp(k_dp, node_features, out_nodes, [hidden_features])
    bits = [jax.random.bits(k_db, (num_nodes, hidden_features), dtype=jnp.uint32)]
    y_drop = fused_mlp(x, dmlp, p=p, dropout_bits=bits)
    jax.block_until_ready(y_drop)
    assert y_drop.shape == (num_nodes, out_nodes)

    print("KERNEL_OK")
</pallas_src>

<mosaic_0001>
module attributes {stable_mosaic.version = 11 : i64} {
  func.func @kernel(%arg0: i32, %arg1: memref<32x12xf32, #tpu.memory_space<vmem>>, %arg2: memref<12x128xf32, #tpu.memory_space<vmem>>, %arg3: memref<1x128xf32, #tpu.memory_space<vmem>>, %arg4: memref<128x128xf32, #tpu.memory_space<vmem>>, %arg5: memref<1x128xf32, #tpu.memory_space<vmem>>, %arg6: memref<32x128xf32, #tpu.memory_space<vmem>>) attributes {dimension_semantics = [#tpu.dimension_semantics<parallel>], iteration_bounds = array<i64: 1>, scalar_prefetch = 0 : i64, scratch_operands = 0 : i64, tpu.core_type = #tpu.core_type<tc>, window_params = [{transform_indices = @transform_0, window_bounds = array<i64: 32, 12>}, {pipeline_mode = #tpu.pipeline_mode<synchronous>, transform_indices = @transform_1, window_bounds = array<i64: 12, 128>}, {pipeline_mode = #tpu.pipeline_mode<synchronous>, transform_indices = @transform_2, window_bounds = array<i64: 1, 128>}, {pipeline_mode = #tpu.pipeline_mode<synchronous>, transform_indices = @transform_3, window_bounds = array<i64: 128, 128>}, {pipeline_mode = #tpu.pipeline_mode<synchronous>, transform_indices = @transform_4, window_bounds = array<i64: 1, 128>}, {transform_indices = @transform_5, window_bounds = array<i64: 32, 128>}]} {
    %c0 = arith.constant 0 : index
    %c0_0 = arith.constant 0 : index
    %0 = vector.load %arg1[%c0, %c0_0] : memref<32x12xf32, #tpu.memory_space<vmem>>, vector<32x12xf32>
    %c0_1 = arith.constant 0 : index
    %c0_2 = arith.constant 0 : index
    %1 = vector.load %arg2[%c0_1, %c0_2] : memref<12x128xf32, #tpu.memory_space<vmem>>, vector<12x128xf32>
    %c0_3 = arith.constant 0 : index
    %c0_4 = arith.constant 0 : index
    %2 = vector.load %arg3[%c0_3, %c0_4] : memref<1x128xf32, #tpu.memory_space<vmem>>, vector<1x128xf32>
    %cst = arith.constant dense<0.000000e+00> : vector<32x128xf32>
    %3 = tpu.matmul %0, %1, %cst {dimension_numbers = #tpu.dot_dimension_numbers<[1], [0], [0], [1], [0, 0, 1, 1], [], []>} : vector<32x12xf32>, vector<12x128xf32>, vector<32x128xf32> -> vector<32x128xf32>
    %4 = vector.broadcast %2 : vector<1x128xf32> to vector<32x128xf32>
    %5 = arith.addf %3, %4 : vector<32x128xf32>
    %cst_5 = arith.constant 0.000000e+00 : f32
    %6 = vector.broadcast %cst_5 : f32 to vector<32x128xf32>
    %7 = arith.cmpf oge, %5, %6 : vector<32x128xf32>
    %cst_6 = arith.constant 0.00999999977 : f32
    %8 = vector.broadcast %cst_6 : f32 to vector<32x128xf32>
    %9 = arith.mulf %8, %5 : vector<32x128xf32>
    %10 = arith.select %7, %5, %9 : vector<32x128xi1>, vector<32x128xf32>
    %c0_7 = arith.constant 0 : index
    %c0_8 = arith.constant 0 : index
    %11 = vector.load %arg4[%c0_7, %c0_8] : memref<128x128xf32, #tpu.memory_space<vmem>>, vector<128x128xf32>
    %cst_9 = arith.constant dense<0.000000e+00> : vector<32x128xf32>
    %12 = tpu.matmul %10, %11, %cst_9 {dimension_numbers = #tpu.dot_dimension_numbers<[1], [0], [0], [1], [0, 0, 1, 1], [], []>} : vector<32x128xf32>, vector<128x128xf32>, vector<32x128xf32> -> vector<32x128xf32>
    %c0_10 = arith.constant 0 : index
    %c0_11 = arith.constant 0 : index
    %13 = vector.load %arg5[%c0_10, %c0_11] : memref<1x128xf32, #tpu.memory_space<vmem>>, vector<1x128xf32>
    %14 = vector.broadcast %13 : vector<1x128xf32> to vector<32x128xf32>
    %15 = arith.addf %12, %14 : vector<32x128xf32>
    %c0_12 = arith.constant 0 : index
    %c0_13 = arith.constant 0 : index
    %16 = vector.load %arg6[%c0_12, %c0_13] : memref<32x128xf32, #tpu.memory_space<vmem>>, vector<32x128xf32>
    tpu.vector_store %arg6[%c0_12, %c0_13], %15 {strides = array<i32>} : memref<32x128xf32, #tpu.memory_space<vmem>>, vector<32x128xf32>,
    return
  }
  func.func @transform_0(%arg0: i32) -> (i32, i32) {
    %c0_i32 = arith.constant 0 : i32
    %c0_i32_0 = arith.constant 0 : i32
    return %arg0, %c0_i32 : i32, i32
  }
  func.func @transform_1(%arg0: i32) -> (i32, i32) {
    %c0_i32 = arith.constant 0 : i32
    %c0_i32_0 = arith.constant 0 : i32
    %c0_i32_1 = arith.constant 0 : i32
    return %c0_i32, %c0_i32_0 : i32, i32
  }
  func.func @transform_2(%arg0: i32) -> (i32, i32) {
    %c0_i32 = arith.constant 0 : i32
    %c0_i32_0 = arith.constant 0 : i32
    %c0_i32_1 = arith.constant 0 : i32
    return %c0_i32, %c0_i32_0 : i32, i32
  }
  func.func @transform_3(%arg0: i32) -> (i32, i32) {
    %c0_i32 = arith.constant 0 : i32
    %c0_i32_0 = arith.constant 0 : i32
    %c0_i32_1 = arith.constant 0 : i32
    return %c0_i32, %c0_i32_0 : i32, i32
  }
  func.func @transform_4(%arg0: i32) -> (i32, i32) {
    %c0_i32 = arith.constant 0 : i32
    %c0_i32_0 = arith.constant 0 : i32
    %c0_i32_1 = arith.constant 0 : i32
    return %c0_i32, %c0_i32_0 : i32, i32
  }
  func.func @transform_5(%arg0: i32) -> (i32, i32) {
    %c0_i32 = arith.constant 0 : i32
    %c0_i32_0 = arith.constant 0 : i32
    return %arg0, %c0_i32 : i32, i32
  }
}

</mosaic_0001>

<llo_original>
// kernel: tpu_custom_call.1
$region0: #{tpu_custom_call.1}
  #allocation0 [shape = 'u32[]', space=smem, size = 0x4, offset = 0x4, fixed_abs, tag = 'smem constant byte address 0x4 - core index']
  #allocation1 [shape = 'u32[144,128]{1,0:T(1,128)}', space=vmem, size = 0x12000, scoped, tag = 'internal scratch']
  %s0 = inlined_call_operand.vmem [shape: f32[32,12], index: 0, kind: input, shape index: {}]
  %s1 = inlined_call_operand.vmem [shape: f32[12,128], index: 1, kind: input, shape index: {}]
  %s2 = inlined_call_operand.vmem [shape: f32[1,128], index: 2, kind: input, shape index: {}]
  %s3 = inlined_call_operand.hbm [shape: f32[128,128], index: 3, kind: input, shape index: {}]
  %s4 = inlined_call_operand.vmem [shape: f32[1,128], index: 4, kind: input, shape index: {}]
  %s5 = inlined_call_operand.hbm [shape: f32[32,128], index: 5, kind: output, shape index: {}]
  %s6 = sld [smem:[#allocation0]]
  $region34: #{tpu_custom_call.1} parent=0
    _
  %s8 = ssub.s32 1, %s6
  %s9 = scalar_select 0, %s8, %s6
  $region1: #{tpu_custom_call.1} parent=0
    #allocation2 [shape = 'u8[65536]{0}', space=vmem, size = 0x10000, scoped, tag = 'input window, operand 3, single buffered']
    #allocation3 [shape = 's32[1]{0}', space=sflag, size = 0x4, scoped, tag = 'scoped memory for tpu_custom_call.1']
    #allocation4 [shape = 's32[1]{0}', space=sflag, size = 0x4, scoped, tag = 'scoped memory for tpu_custom_call.1']
    #allocation5 [shape = 'u8[16384]{0}', space=vmem, size = 0x4000, scoped, tag = 'output window, operand 0, single buffered']
    %10 = vsyncpa [#allocation3], 0
    %11 = vsyncpa [#allocation4], 0
    // Predicated region
    $region2: #{tpu_custom_call.1} parent=1 // pred_check
      _
    $region3: #{tpu_custom_call.1} parent=1 // pred_check_branch
      %13 = sbr.rel (0) target = $region5
    $region4: #{tpu_custom_call.1} parent=1 // pred_region
      _
    $region5: #{tpu_custom_call.1} parent=1 // pred_fallthru
      _
    // Predicated region
    $region6: #{tpu_custom_call.1} parent=1 // pred_check
      _
    $region7: #{tpu_custom_call.1} parent=1 // pred_check_branch
      %15 = sbr.rel (0) target = $region9
    $region8: #{tpu_custom_call.1} parent=1 // pred_region
      _
    $region9: #{tpu_custom_call.1} parent=1 // pred_fallthru
      _
    // Predicated region
    $region10: #{tpu_custom_call.1} parent=1 // pred_check
      _
    $region11: #{tpu_custom_call.1} parent=1 // pred_check_branch
      %17 = sbr.rel (0) target = $region13
    $region12: #{tpu_custom_call.1} parent=1 // pred_region
      _
    $region13: #{tpu_custom_call.1} parent=1 // pred_fallthru
      _
    // Predicated region
    $region14: #{tpu_custom_call.1} parent=1 // pred_check
      _
    $region15: #{tpu_custom_call.1} parent=1 // pred_check_branch
      %19 = sbr.rel (0) target = $region17
    $region16: #{tpu_custom_call.1} parent=1 // pred_region
      %s21 = ssub.s32 2048, 2048
      %22 = vsyncadd [#allocation3], %s21
      %s23 = sshll.u32 [#allocation2], 4
      %s24 = int_to_ptr.vmem [resolvable:$true] %s23
      %29 = dma.hbm_to_vmem [thread:$0]  %s3, 2048, %s24, [#allocation3], 128, 128, 8
    $region17: #{tpu_custom_call.1} parent=1 // pred_fallthru
      _
    // Predicated region
    $region18: #{tpu_custom_call.1} parent=1 // pred_check
      _
    $region19: #{tpu_custom_call.1} parent=1 // pred_check_branch
      %31 = sbr.rel (0) target = $region21
    $region20: #{tpu_custom_call.1} parent=1 // pred_region
      _
    $region21: #{tpu_custom_call.1} parent=1 // pred_fallthru
      _
    // Predicated region
    $region22: #{tpu_custom_call.1} parent=1 // pred_check
      _
    $region23: #{tpu_custom_call.1} parent=1 // pred_check_branch
      %33 = sbr.rel (0) target = $region25
    $region24: #{tpu_custom_call.1} parent=1 // pred_region
      %34 = dma.done [#allocation3], 2048
    $region25: #{tpu_custom_call.1} parent=1 // pred_fallthru
      _
    %v35 = vld [vmem:[%s0] sm:$0xff]
    %v36 = vld [vmem:[%s0 + $0x8] sm:$0xff]
    %v37 = vld [vmem:[%s0 + $0x10] sm:$0xff]
    %v38 = vld [vmem:[%s0 + $0x18] sm:$0xff]
    %v39 = vld [vmem:[%s1] sm:$0xff]
    %v40 = vld [vmem:[%s1 + $0x8] sm:$0xf]
    %v41 = vld [vmem:[%s2] sm:$0x1]
    %v43 = vlaneseq
    %v44 = vshrl.u32 %v43, 7
    %v45 = vsub.s32 0, %v44
    %v46 = vrot.slane %v41, %v45
    %vm48 = vcmask 97280
    %v50 = vsel %vm48, %v35, 0
    %v53 = vsel %vm48, %v36, 0
    %v56 = vsel %vm48, %v37, 0
    %v59 = vsel %vm48, %v38, 0
    %vm61 = vcmask 1043456
    %v63 = vsel %vm61, %v40, 0
    %65 = vmatprep.subr.mxu0 0.0
    %66 = vmatpush1.msra.mxu0 %v39
    %67 = vmatprep.subr.mxu0 0.0
    %68 = vmatpush1.msra.mxu0 %v63
    %69 = vmatprep.subr.mxu0 0.0
    %70 = vmatpush1.msra.mxu0 0.0
    %71 = vmatprep.subr.mxu0 0.0
    %72 = vmatpush1.msra.mxu0 0.0
    %73 = vmatprep.subr.mxu0 0.0
    %74 = vmatpush1.msra.mxu0 0.0
    %75 = vmatprep.subr.mxu0 0.0
    %76 = vmatpush1.msra.mxu0 0.0
    %77 = vmatprep.subr.mxu0 0.0
    %78 = vmatpush1.msra.mxu0 0.0
    %79 = vmatprep.subr.mxu0 0.0
    %80 = vmatpush1.msra.mxu0 0.0
    %81 = vmatprep.subr.mxu0 0.0
    %82 = vmatpush1.msra.mxu0 0.0
    %83 = vmatprep.subr.mxu0 0.0
    %84 = vmatpush1.msra.mxu0 0.0
    %85 = vmatprep.subr.mxu0 0.0
    %86 = vmatpush1.msra.mxu0 0.0
    %87 = vmatprep.subr.mxu0 0.0
    %88 = vmatpush1.msra.mxu0 0.0
    %89 = vmatprep.subr.mxu0 0.0
    %90 = vmatpush1.msra.mxu0 0.0
    %91 = vmatprep.subr.mxu0 0.0
    %92 = vmatpush1.msra.mxu0 0.0
    %93 = vmatprep.subr.mxu0 0.0
    %94 = vmatpush1.msra.mxu0 0.0
    %95 = vmatprep.subr.mxu0 0.0
    %96 = vmatpush1.msra.mxu0 0.0
    %97 = vmatprep.subr.mxu0 0.0
    %98 = vmatpush1.msra.mxu0 0.0
    %99 = vmatprep.subr.mxu0 0.0
    %100 = vmatpush1.msra.mxu0 0.0
    %101 = vmatprep.subr.mxu0 0.0
    %102 = vmatpush1.msra.mxu0 0.0
    %103 = vmatprep.subr.mxu0 0.0
    %104 = vmatpush1.msra.mxu0 0.0
    %105 = vmatprep.subr.mxu0 0.0
    %106 = vmatpush1.msra.mxu0 0.0
    %107 = vmatprep.subr.mxu0 0.0
    %108 = vmatpush1.msra.mxu0 0.0
    %109 = vmatprep.subr.mxu0 0.0
    %110 = vmatpush1.msra.mxu0 0.0
    %111 = vmatprep.subr.mxu0 0.0
    %112 = vmatpush1.msra.mxu0 0.0
    %113 = vmatprep.subr.mxu0 0.0
    %114 = vmatpush1.msra.mxu0 0.0
    %115 = vmatprep.subr.mxu0 0.0
    %116 = vmatpush1.msra.mxu0 0.0
    %117 = vmatprep.subr.mxu0 0.0
    %118 = vmatpush1.msra.mxu0 0.0
    %119 = vmatprep.subr.mxu0 0.0
    %120 = vmatpush1.msra.mxu0 0.0
    %121 = vmatprep.subr.mxu0 0.0
    %122 = vmatpush1.msra.mxu0 0.0
    %123 = vmatprep.subr.mxu0 0.0
    %124 = vmatpush1.msra.mxu0 0.0
    %125 = vmatprep.subr.mxu0 0.0
    %126 = vmatpush1.msra.mxu0 0.0
    %127 = vmatprep.subr.mxu0 0.0
    %128 = vmatpush1.msra.mxu0 0.0
    %129 = vmatprep.mubr.f32.mxu0 0.0
    %130 = vmatmul.mubr.f32.gmra.mrb[0].mxu0 %v50
    %v131 = vpop.f32.mrb[0].mxu0
    %v132 = vadd.f32 %v46, %v131
    %v133 = vpop.f32.mrb[0].mxu0
    %134 = vmatprep.mubr.f32.mxu0 0.0
    %135 = vmatmul.mubr.f32.gmra.mrb[0].mxu0 %v53
    %v136 = vpop.f32.mrb[0].mxu0
    %v137 = vadd.f32 %v46, %v136
    %v138 = vpop.f32.mrb[0].mxu0
    %139 = vmatprep.mubr.f32.mxu0 0.0
    %140 = vmatmul.mubr.f32.gmra.mrb[0].mxu0 %v56
    %v141 = vpop.f32.mrb[0].mxu0
    %v142 = vadd.f32 %v46, %v141
    %v143 = vpop.f32.mrb[0].mxu0
    %144 = vmatprep.mubr.f32.mxu0 0.0
    %145 = vmatmul.mubr.f32.gmra.mrb[0].mxu0 %v59
    %v146 = vpop.f32.mrb[0].mxu0
    %v147 = vadd.f32 %v46, %v146
    %v148 = vpop.f32.mrb[0].mxu0
    %149 = vdwg.mxu0
    %vm150 = vcmp.ge.f32.partialorder %v132, 0.0
    %vm151 = vcmp.ge.f32.partialorder %v137, 0.0
    %vm152 = vcmp.ge.f32.partialorder %v142, 0.0
    %vm153 = vcmp.ge.f32.partialorder %v147, 0.0
    %v154 = vmul.f32 %v132, 0.01
    %v155 = vmul.f32 %v137, 0.01
    %v156 = vmul.f32 %v142, 0.01
    %v157 = vmul.f32 %v147, 0.01
    %v158 = vsel %vm150, %v132, %v154
    %v159 = vsel %vm151, %v137, %v155
    %v160 = vsel %vm152, %v142, %v156
    %v161 = vsel %vm153, %v147, %v157
    %v162 = vld [vmem:[#allocation2] sm:$0xff]
    %v163 = vld [vmem:[#allocation2 + $0x8] sm:$0xff]
    %v164 = vld [vmem:[#allocation2 + $0x10] sm:$0xff]
    %v165 = vld [vmem:[#allocation2 + $0x18] sm:$0xff]
    %v166 = vld [vmem:[#allocation2 + $0x20] sm:$0xff]
    %v167 = vld [vmem:[#allocation2 + $0x28] sm:$0xff]
    %v168 = vld [vmem:[#allocation2 + $0x30] sm:$0xff]
    %v169 = vld [vmem:[#allocation2 + $0x38] sm:$0xff]
    %v170 = vld [vmem:[#allocation2 + $0x40] sm:$0xff]
    %v171 = vld [vmem:[#allocation2 + $0x48] sm:$0xff]
    %v172 = vld [vmem:[#allocation2 + $0x50] sm:$0xff]
    %v173 = vld [vmem:[#allocation2 + $0x58] sm:$0xff]
    %v174 = vld [vmem:[#allocation2 + $0x60] sm:$0xff]
    %v175 = vld [vmem:[#allocation2 + $0x68] sm:$0xff]
    %v176 = vld [vmem:[#allocation2 + $0x70] sm:$0xff]
    %v177 = vld [vmem:[#allocation2 + $0x78] sm:$0xff]
    %v178 = vld [vmem:[%s4] sm:$0x1]
    %v180 = vlaneseq
    %v181 = vshrl.u32 %v180, 7
    %v182 = vsub.s32 0, %v181
    %v183 = vrot.slane %v178, %v182
    %185 = vmatprep.subr.mxu0 0.0
    %186 = vmatpush1.msra.mxu0 %v162
    %187 = vmatprep.subr.mxu0 0.0
    %188 = vmatpush1.msra.mxu0 %v163
    %189 = vmatprep.subr.mxu0 0.0
    %190 = vmatpush1.msra.mxu0 %v164
    %191 = vmatprep.subr.mxu0 0.0
    %192 = vmatpush1.msra.mxu0 %v165
    %193 = vmatprep.subr.mxu0 0.0
    %194 = vmatpush1.msra.mxu0 %v166
    %195 = vmatprep.subr.mxu0 0.0
    %196 = vmatpush1.msra.mxu0 %v167
    %197 = vmatprep.subr.mxu0 0.0
    %198 = vmatpush1.msra.mxu0 %v168
    %199 = vmatprep.subr.mxu0 0.0
    %200 = vmatpush1.msra.mxu0 %v169
    %201 = vmatprep.subr.mxu0 0.0
    %202 = vmatpush1.msra.mxu0 %v170
    %203 = vmatprep.subr.mxu0 0.0
    %204 = vmatpush1.msra.mxu0 %v171
    %205 = vmatprep.subr.mxu0 0.0
    %206 = vmatpush1.msra.mxu0 %v172
    %207 = vmatprep.subr.mxu0 0.0
    %208 = vmatpush1.msra.mxu0 %v173
    %209 = vmatprep.subr.mxu0 0.0
    %210 = vmatpush1.msra.mxu0 %v174
    %211 = vmatprep.subr.mxu0 0.0
    %212 = vmatpush1.msra.mxu0 %v175
    %213 = vmatprep.subr.mxu0 0.0
    %214 = vmatpush1.msra.mxu0 %v176
    %215 = vmatprep.subr.mxu0 0.0
    %216 = vmatpush1.msra.mxu0 %v177
    %217 = vmatprep.subr.mxu0 0.0
    %218 = vmatpush1.msra.mxu0 0.0
    %219 = vmatprep.subr.mxu0 0.0
    %220 = vmatpush1.msra.mxu0 0.0
    %221 = vmatprep.subr.mxu0 0.0
    %222 = vmatpush1.msra.mxu0 0.0
    %223 = vmatprep.subr.mxu0 0.0
    %224 = vmatpush1.msra.mxu0 0.0
    %225 = vmatprep.subr.mxu0 0.0
    %226 = vmatpush1.msra.mxu0 0.0
    %227 = vmatprep.subr.mxu0 0.0
    %228 = vmatpush1.msra.mxu0 0.0
    %229 = vmatprep.subr.mxu0 0.0
    %230 = vmatpush1.msra.mxu0 0.0
    %231 = vmatprep.subr.mxu0 0.0
    %232 = vmatpush1.msra.mxu0 0.0
    %233 = vmatprep.subr.mxu0 0.0
    %234 = vmatpush1.msra.mxu0 0.0
    %235 = vmatprep.subr.mxu0 0.0
    %236 = vmatpush1.msra.mxu0 0.0
    %237 = vmatprep.subr.mxu0 0.0
    %238 = vmatpush1.msra.mxu0 0.0
    %239 = vmatprep.subr.mxu0 0.0
    %240 = vmatpush1.msra.mxu0 0.0
    %241 = vmatprep.subr.mxu0 0.0
    %242 = vmatpush1.msra.mxu0 0.0
    %243 = vmatprep.subr.mxu0 0.0
    %244 = vmatpush1.msra.mxu0 0.0
    %245 = vmatprep.subr.mxu0 0.0
    %246 = vmatpush1.msra.mxu0 0.0
    %247 = vmatprep.subr.mxu0 0.0
    %248 = vmatpush1.msra.mxu0 0.0
    %249 = vmatprep.mubr.f32.mxu0 0.0
    %250 = vmatmul.mubr.f32.gmra.mrb[0].mxu0 %v158
    %v251 = vpop.f32.mrb[0].mxu0
    %v252 = vadd.f32 %v183, %v251
    %v253 = vpop.f32.mrb[0].mxu0
    %254 = vmatprep.mubr.f32.mxu0 0.0
    %255 = vmatmul.mubr.f32.gmra.mrb[0].mxu0 %v159
    %v256 = vpop.f32.mrb[0].mxu0
    %v257 = vadd.f32 %v183, %v256
    %v258 = vpop.f32.mrb[0].mxu0
    %259 = vmatprep.mubr.f32.mxu0 0.0
    %260 = vmatmul.mubr.f32.gmra.mrb[0].mxu0 %v160
    %v261 = vpop.f32.mrb[0].mxu0
    %v262 = vadd.f32 %v183, %v261
    %v263 = vpop.f32.mrb[0].mxu0
    %264 = vmatprep.mubr.f32.mxu0 0.0
    %265 = vmatmul.mubr.f32.gmra.mrb[0].mxu0 %v161
    %v266 = vpop.f32.mrb[0].mxu0
    %v267 = vadd.f32 %v183, %v266
    %v268 = vpop.f32.mrb[0].mxu0
    %269 = vdwg.mxu0
    %270 = vst [vmem:[#allocation5] sm:$0xff] %v252
    %271 = vst [vmem:[#allocation5 + $0x8] sm:$0xff] %v257
    %272 = vst [vmem:[#allocation5 + $0x10] sm:$0xff] %v262
    %273 = vst [vmem:[#allocation5 + $0x18] sm:$0xff] %v267
    // Predicated region
    $region26: #{tpu_custom_call.1} parent=1 // pred_check
      _
    $region27: #{tpu_custom_call.1} parent=1 // pred_check_branch
      %275 = sbr.rel (0) target = $region29
    $region28: #{tpu_custom_call.1} parent=1 // pred_region
      %s277 = ssub.s32 512, 512
      %278 = vsyncadd [#allocation4], %s277
      %s279 = sshll.u32 [#allocation5], 4
      %s280 = int_to_ptr.vmem [resolvable:$true] %s279
      %285 = dma.vmem_to_hbm [thread:$0]  %s280, 512, %s5, [#allocation4], 128, 128, 8
    $region29: #{tpu_custom_call.1} parent=1 // pred_fallthru
      _
    // Predicated region
    $region30: #{tpu_custom_call.1} parent=1 // pred_check
      _
    $region31: #{tpu_custom_call.1} parent=1 // pred_check_branch
      %287 = sbr.rel (0) target = $region33
    $region32: #{tpu_custom_call.1} parent=1 // pred_region
      %288 = dma.done [#allocation4], 512
    $region33: #{tpu_custom_call.1} parent=1 // pred_fallthru
      _
    %289 = vsyncpa [#allocation3], 1
    %290 = vsyncpa [#allocation4], 1

</llo_original>
